<compile_context>
chip_gen: v7x
topology: tpu7x:2x2x1
jax: 0.10.0
libtpu: 0.0.40
codegen_flags: <defaults>
</compile_context>

<pallas_src>
import jax
import jax.numpy as jnp
from jax import lax
from jax.experimental import pallas as pl
from jax.experimental.pallas import tpu as pltpu


def downsample_kernel(xq_ref, w_ref, b_ref, o_ref):
    # xq_ref: (1, 4, Hq, Wq, C) bf16  parity-split zero-padded NHWC input:
    #         xq[0, 2*ph+pw, a, b, :] == x_padded[2a+ph, 2b+pw, :]
    # w_ref : (9, C, C)          bf16  weight per tap t = kh*3+kw, [c_in, c_out]
    # b_ref : (1, C)             f32   bias
    # o_ref : (1, TH, Wo, C)     f32   output rows [r*TH, (r+1)*TH)
    _, TH, Wo, C = o_ref.shape
    M = TH * Wo
    row0 = pl.multiple_of(pl.program_id(1) * TH, TH)

    acc = None
    for kh in range(3):
        qh, ph = kh // 2, kh % 2
        for kw in range(3):
            qw, pw = kw // 2, kw % 2
            par = 2 * ph + pw
            # contiguous (TH, Wo, C) patch of the (ph, pw) parity plane
            patch = xq_ref[0, par, pl.ds(row0 + qh, TH), pl.ds(qw, Wo), :]
            lhs = patch.reshape(M, C)                          # (M, C) bf16
            d = jnp.dot(lhs, w_ref[kh * 3 + kw],
                        preferred_element_type=jnp.float32)    # (M, C) f32, MXU
            acc = d if acc is None else acc + d

    acc = acc + b_ref[...]                                     # (M, C) + (1, C)
    o_ref[0] = acc.reshape(TH, Wo, C).astype(o_ref.dtype)


def _pick_row_tile(Ho, Wo, C):
    # >= 2 row tiles per image (more pipeline steps than N) and <= ~2 MiB f32
    # per output tile; must divide Ho.
    budget = max(1, (2 * 1024 * 1024) // (4 * Wo * max(C, 1)))
    th = max(1, min(Ho // 2 if Ho >= 2 else Ho, budget))
    while Ho % th:
        th -= 1
    return th


def downsample(x_nchw, weight, bias):
    """Conv2d(dim, dim, 3, stride=2, padding=1) forward (PyTorch Downsample).

    x_nchw: (N, C, H, W) f32
    weight: (C_out, C_in, 3, 3)  -- PyTorch Conv2d layout (C_out == C_in == C)
    bias:   (C,)
    returns (N, C, Ho, Wo) f32 NCHW, Ho = (H+1)//2, Wo = (W+1)//2 (PyTorch semantics)
    """
    N, C, H, W = x_nchw.shape
    Ho, Wo = (H + 1) // 2, (W + 1) // 2
    Hq, Wq = Ho + 1, Wo + 1
    TH = _pick_row_tile(Ho, Wo, C)

    # pad + NCHW->NHWC + stride-2 parity split + bf16 cast (one fused layout pass)
    x = jnp.transpose(x_nchw, (0, 2, 3, 1))                       # (N, H, W, C)
    xp = jnp.pad(x, ((0, 0),
                     (1, 2 * Hq - H - 1),                         # >=1 bottom zero pad
                     (1, 2 * Wq - W - 1),                         # >=1 right  zero pad
                     (0, 0)))                                     # (N, 2Hq, 2Wq, C)
    xq = xp.reshape(N, Hq, 2, Wq, 2, C)
    xq = jnp.transpose(xq, (0, 2, 4, 1, 3, 5))                    # (N, 2, 2, Hq, Wq, C)
    xq = xq.reshape(N, 4, Hq, Wq, C).astype(jnp.bfloat16)

    # weight -> (tap, c_in, c_out), tap = kh*3 + kw, bf16 for the MXU
    w = jnp.transpose(weight, (2, 3, 1, 0)).reshape(9, C, C).astype(jnp.bfloat16)
    b = bias.reshape(1, C).astype(jnp.float32)

    out = pl.pallas_call(
        downsample_kernel,
        out_shape=jax.ShapeDtypeStruct((N, Ho, Wo, C), jnp.float32),
        grid_spec=pltpu.PrefetchScalarGridSpec(
            num_scalar_prefetch=0,
            grid=(N, Ho // TH),
            in_specs=[
                pl.BlockSpec((1, 4, Hq, Wq, C),
                             lambda n, r: (n, 0, 0, 0, 0)),       # resident across r
                pl.BlockSpec((9, C, C), lambda n, r: (0, 0, 0)),  # resident weight
                pl.BlockSpec((1, C), lambda n, r: (0, 0)),        # resident bias
            ],
            out_specs=pl.BlockSpec((1, TH, Wo, C),
                                   lambda n, r: (n, r, 0, 0)),
        ),
        compiler_params=pltpu.CompilerParams(
            dimension_semantics=("parallel", "parallel")),
    )(xq, w, b)

    return jnp.transpose(out, (0, 3, 1, 2))                       # NCHW


def ref_downsample(x_nchw, weight, bias):
    """Pure-JAX reference for Conv2d(dim, dim, 3, stride=2, padding=1)."""
    y = lax.conv_general_dilated(
        x_nchw, weight,
        window_strides=(2, 2),
        padding=[(1, 1), (1, 1)],
        dimension_numbers=("NCHW", "OIHW", "NCHW"))
    return y + bias[None, :, None, None]


if __name__ == "__main__":
    key = jax.random.PRNGKey(0)
    k1, k2, k3 = jax.random.split(key, 3)

    N, C, H, W = 2, 4, 16, 16          # dim = 4
    x = jax.random.normal(k1, (N, C, H, W), jnp.float32)
    weight = 0.1 * jax.random.normal(k2, (C, C, 3, 3), jnp.float32)  # (C_out, C_in, 3, 3)
    bias = 0.1 * jax.random.normal(k3, (C,), jnp.float32)

    y = jax.jit(downsample)(x, weight, bias)
    jax.block_until_ready(y)
    assert y.shape == (N, C, H // 2, W // 2)

    y_ref = ref_downsample(x, weight, bias)
    # bf16 matmul operands (f32 accumulation) -> tolerance loosened vs pure-f32 ref.
    err = float(jnp.max(jnp.abs(y - y_ref)))
    assert jnp.allclose(y, y_ref, atol=3e-2, rtol=3e-2), err

    print("KERNEL_OK")
</pallas_src>

<mosaic_0001>
module attributes {stable_mosaic.version = 11 : i64} {
  func.func @downsample_kernel(%arg0: i32, %arg1: i32, %arg2: memref<1x4x9x9x4xbf16, #tpu.memory_space<vmem>>, %arg3: memref<9x4x4xbf16, #tpu.memory_space<vmem>>, %arg4: memref<1x4xf32, #tpu.memory_space<vmem>>, %arg5: memref<1x4x8x4xf32, #tpu.memory_space<vmem>>) attributes {dimension_semantics = [#tpu.dimension_semantics<parallel>, #tpu.dimension_semantics<parallel>], iteration_bounds = array<i64: 2, 2>, scalar_prefetch = 0 : i64, scratch_operands = 0 : i64, tpu.core_type = #tpu.core_type<tc>, window_params = [{transform_indices = @transform_0, window_bounds = array<i64: 1, 4, 9, 9, 4>}, {pipeline_mode = #tpu.pipeline_mode<synchronous>, transform_indices = @transform_1, window_bounds = array<i64: 9, 4, 4>}, {pipeline_mode = #tpu.pipeline_mode<synchronous>, transform_indices = @transform_2, window_bounds = array<i64: 1, 4>}, {transform_indices = @transform_3, window_bounds = array<i64: 1, 4, 8, 4>}]} {
    %c4_i32 = arith.constant 4 : i32
    %0 = arith.muli %arg1, %c4_i32 : i32
    %1 = tpu.assume_multiple %0, 4 : i32
    %c0_i32 = arith.constant 0 : i32
    %2 = arith.addi %1, %c0_i32 : i32
    %c0 = arith.constant 0 : index
    %c0_0 = arith.constant 0 : index
    %3 = arith.index_cast %2 : i32 to index
    %c0_1 = arith.constant 0 : index
    %c0_2 = arith.constant 0 : index
    %4 = vector.load %arg2[%c0, %c0_0, %3, %c0_1, %c0_2] : memref<1x4x9x9x4xbf16, #tpu.memory_space<vmem>>, vector<1x1x4x8x4xbf16>
    %5 = vector.shape_cast %4 : vector<1x1x4x8x4xbf16> to vector<4x8x4xbf16>
    %6 = vector.shape_cast %5 : vector<4x8x4xbf16> to vector<32x4xbf16>
    %c0_3 = arith.constant 0 : index
    %c0_4 = arith.constant 0 : index
    %c0_5 = arith.constant 0 : index
    %7 = vector.load %arg3[%c0_3, %c0_4, %c0_5] : memref<9x4x4xbf16, #tpu.memory_space<vmem>>, vector<1x4x4xbf16>
    %8 = vector.shape_cast %7 : vector<1x4x4xbf16> to vector<4x4xbf16>
    %cst = arith.constant dense<0.000000e+00> : vector<32x4xf32>
    %9 = tpu.matmul %6, %8, %cst {dimension_numbers = #tpu.dot_dimension_numbers<[1], [0], [0], [1], [0, 0, 1, 1], [], []>} : vector<32x4xbf16>, vector<4x4xbf16>, vector<32x4xf32> -> vector<32x4xf32>
    %c0_i32_6 = arith.constant 0 : i32
    %10 = arith.addi %1, %c0_i32_6 : i32
    %c0_7 = arith.constant 0 : index
    %c1 = arith.constant 1 : index
    %11 = arith.index_cast %10 : i32 to index
    %c0_8 = arith.constant 0 : index
    %c0_9 = arith.constant 0 : index
    %12 = vector.load %arg2[%c0_7, %c1, %11, %c0_8, %c0_9] : memref<1x4x9x9x4xbf16, #tpu.memory_space<vmem>>, vector<1x1x4x8x4xbf16>
    %13 = vector.shape_cast %12 : vector<1x1x4x8x4xbf16> to vector<4x8x4xbf16>
    %14 = vector.shape_cast %13 : vector<4x8x4xbf16> to vector<32x4xbf16>
    %c1_10 = arith.constant 1 : index
    %c0_11 = arith.constant 0 : index
    %c0_12 = arith.constant 0 : index
    %15 = vector.load %arg3[%c1_10, %c0_11, %c0_12] : memref<9x4x4xbf16, #tpu.memory_space<vmem>>, vector<1x4x4xbf16>
    %16 = vector.shape_cast %15 : vector<1x4x4xbf16> to vector<4x4xbf16>
    %cst_13 = arith.constant dense<0.000000e+00> : vector<32x4xf32>
    %17 = tpu.matmul %14, %16, %cst_13 {dimension_numbers = #tpu.dot_dimension_numbers<[1], [0], [0], [1], [0, 0, 1, 1], [], []>} : vector<32x4xbf16>, vector<4x4xbf16>, vector<32x4xf32> -> vector<32x4xf32>
    %18 = arith.addf %9, %17 : vector<32x4xf32>
    %c0_i32_14 = arith.constant 0 : i32
    %19 = arith.addi %1, %c0_i32_14 : i32
    %c0_15 = arith.constant 0 : index
    %c0_16 = arith.constant 0 : index
    %20 = arith.index_cast %19 : i32 to index
    %c1_17 = arith.constant 1 : index
    %c0_18 = arith.constant 0 : index
    %21 = vector.load %arg2[%c0_15, %c0_16, %20, %c1_17, %c0_18] : memref<1x4x9x9x4xbf16, #tpu.memory_space<vmem>>, vector<1x1x4x8x4xbf16>
    %22 = vector.shape_cast %21 : vector<1x1x4x8x4xbf16> to vector<4x8x4xbf16>
    %23 = vector.shape_cast %22 : vector<4x8x4xbf16> to vector<32x4xbf16>
    %c2 = arith.constant 2 : index
    %c0_19 = arith.constant 0 : index
    %c0_20 = arith.constant 0 : index
    %24 = vector.load %arg3[%c2, %c0_19, %c0_20] : memref<9x4x4xbf16, #tpu.memory_space<vmem>>, vector<1x4x4xbf16>
    %25 = vector.shape_cast %24 : vector<1x4x4xbf16> to vector<4x4xbf16>
    %cst_21 = arith.constant dense<0.000000e+00> : vector<32x4xf32>
    %26 = tpu.matmul %23, %25, %cst_21 {dimension_numbers = #tpu.dot_dimension_numbers<[1], [0], [0], [1], [0, 0, 1, 1], [], []>} : vector<32x4xbf16>, vector<4x4xbf16>, vector<32x4xf32> -> vector<32x4xf32>
    %27 = arith.addf %18, %26 : vector<32x4xf32>
    %c0_i32_22 = arith.constant 0 : i32
    %28 = arith.addi %1, %c0_i32_22 : i32
    %c0_23 = arith.constant 0 : index
    %c2_24 = arith.constant 2 : index
    %29 = arith.index_cast %28 : i32 to index
    %c0_25 = arith.constant 0 : index
    %c0_26 = arith.constant 0 : index
    %30 = vector.load %arg2[%c0_23, %c2_24, %29, %c0_25, %c0_26] : memref<1x4x9x9x4xbf16, #tpu.memory_space<vmem>>, vector<1x1x4x8x4xbf16>
    %31 = vector.shape_cast %30 : vector<1x1x4x8x4xbf16> to vector<4x8x4xbf16>
    %32 = vector.shape_cast %31 : vector<4x8x4xbf16> to vector<32x4xbf16>
    %c3 = arith.constant 3 : index
    %c0_27 = arith.constant 0 : index
    %c0_28 = arith.constant 0 : index
    %33 = vector.load %arg3[%c3, %c0_27, %c0_28] : memref<9x4x4xbf16, #tpu.memory_space<vmem>>, vector<1x4x4xbf16>
    %34 = vector.shape_cast %33 : vector<1x4x4xbf16> to vector<4x4xbf16>
    %cst_29 = arith.constant dense<0.000000e+00> : vector<32x4xf32>
    %35 = tpu.matmul %32, %34, %cst_29 {dimension_numbers = #tpu.dot_dimension_numbers<[1], [0], [0], [1], [0, 0, 1, 1], [], []>} : vector<32x4xbf16>, vector<4x4xbf16>, vector<32x4xf32> -> vector<32x4xf32>
    %36 = arith.addf %27, %35 : vector<32x4xf32>
    %c0_i32_30 = arith.constant 0 : i32
    %37 = arith.addi %1, %c0_i32_30 : i32
    %c0_31 = arith.constant 0 : index
    %c3_32 = arith.constant 3 : index
    %38 = arith.index_cast %37 : i32 to index
    %c0_33 = arith.constant 0 : index
    %c0_34 = arith.constant 0 : index
    %39 = vector.load %arg2[%c0_31, %c3_32, %38, %c0_33, %c0_34] : memref<1x4x9x9x4xbf16, #tpu.memory_space<vmem>>, vector<1x1x4x8x4xbf16>
    %40 = vector.shape_cast %39 : vector<1x1x4x8x4xbf16> to vector<4x8x4xbf16>
    %41 = vector.shape_cast %40 : vector<4x8x4xbf16> to vector<32x4xbf16>
    %c4 = arith.constant 4 : index
    %c0_35 = arith.constant 0 : index
    %c0_36 = arith.constant 0 : index
    %42 = vector.load %arg3[%c4, %c0_35, %c0_36] : memref<9x4x4xbf16, #tpu.memory_space<vmem>>, vector<1x4x4xbf16>
    %43 = vector.shape_cast %42 : vector<1x4x4xbf16> to vector<4x4xbf16>
    %cst_37 = arith.constant dense<0.000000e+00> : vector<32x4xf32>
    %44 = tpu.matmul %41, %43, %cst_37 {dimension_numbers = #tpu.dot_dimension_numbers<[1], [0], [0], [1], [0, 0, 1, 1], [], []>} : vector<32x4xbf16>, vector<4x4xbf16>, vector<32x4xf32> -> vector<32x4xf32>
    %45 = arith.addf %36, %44 : vector<32x4xf32>
    %c0_i32_38 = arith.constant 0 : i32
    %46 = arith.addi %1, %c0_i32_38 : i32
    %c0_39 = arith.constant 0 : index
    %c2_40 = arith.constant 2 : index
    %47 = arith.index_cast %46 : i32 to index
    %c1_41 = arith.constant 1 : index
    %c0_42 = arith.constant 0 : index
    %48 = vector.load %arg2[%c0_39, %c2_40, %47, %c1_41, %c0_42] : memref<1x4x9x9x4xbf16, #tpu.memory_space<vmem>>, vector<1x1x4x8x4xbf16>
    %49 = vector.shape_cast %48 : vector<1x1x4x8x4xbf16> to vector<4x8x4xbf16>
    %50 = vector.shape_cast %49 : vector<4x8x4xbf16> to vector<32x4xbf16>
    %c5 = arith.constant 5 : index
    %c0_43 = arith.constant 0 : index
    %c0_44 = arith.constant 0 : index
    %51 = vector.load %arg3[%c5, %c0_43, %c0_44] : memref<9x4x4xbf16, #tpu.memory_space<vmem>>, vector<1x4x4xbf16>
    %52 = vector.shape_cast %51 : vector<1x4x4xbf16> to vector<4x4xbf16>
    %cst_45 = arith.constant dense<0.000000e+00> : vector<32x4xf32>
    %53 = tpu.matmul %50, %52, %cst_45 {dimension_numbers = #tpu.dot_dimension_numbers<[1], [0], [0], [1], [0, 0, 1, 1], [], []>} : vector<32x4xbf16>, vector<4x4xbf16>, vector<32x4xf32> -> vector<32x4xf32>
    %54 = arith.addf %45, %53 : vector<32x4xf32>
    %c1_i32 = arith.constant 1 : i32
    %55 = arith.addi %1, %c1_i32 : i32
    %c0_46 = arith.constant 0 : index
    %c0_47 = arith.constant 0 : index
    %56 = arith.index_cast %55 : i32 to index
    %c0_48 = arith.constant 0 : index
    %c0_49 = arith.constant 0 : index
    %57 = vector.load %arg2[%c0_46, %c0_47, %56, %c0_48, %c0_49] : memref<1x4x9x9x4xbf16, #tpu.memory_space<vmem>>, vector<1x1x4x8x4xbf16>
    %58 = vector.shape_cast %57 : vector<1x1x4x8x4xbf16> to vector<4x8x4xbf16>
    %59 = vector.shape_cast %58 : vector<4x8x4xbf16> to vector<32x4xbf16>
    %c6 = arith.constant 6 : index
    %c0_50 = arith.constant 0 : index
    %c0_51 = arith.constant 0 : index
    %60 = vector.load %arg3[%c6, %c0_50, %c0_51] : memref<9x4x4xbf16, #tpu.memory_space<vmem>>, vector<1x4x4xbf16>
    %61 = vector.shape_cast %60 : vector<1x4x4xbf16> to vector<4x4xbf16>
    %cst_52 = arith.constant dense<0.000000e+00> : vector<32x4xf32>
    %62 = tpu.matmul %59, %61, %cst_52 {dimension_numbers = #tpu.dot_dimension_numbers<[1], [0], [0], [1], [0, 0, 1, 1], [], []>} : vector<32x4xbf16>, vector<4x4xbf16>, vector<32x4xf32> -> vector<32x4xf32>
    %63 = arith.addf %54, %62 : vector<32x4xf32>
    %c1_i32_53 = arith.constant 1 : i32
    %64 = arith.addi %1, %c1_i32_53 : i32
    %c0_54 = arith.constant 0 : index
    %c1_55 = arith.constant 1 : index
    %65 = arith.index_cast %64 : i32 to index
    %c0_56 = arith.constant 0 : index
    %c0_57 = arith.constant 0 : index
    %66 = vector.load %arg2[%c0_54, %c1_55, %65, %c0_56, %c0_57] : memref<1x4x9x9x4xbf16, #tpu.memory_space<vmem>>, vector<1x1x4x8x4xbf16>
    %67 = vector.shape_cast %66 : vector<1x1x4x8x4xbf16> to vector<4x8x4xbf16>
    %68 = vector.shape_cast %67 : vector<4x8x4xbf16> to vector<32x4xbf16>
    %c7 = arith.constant 7 : index
    %c0_58 = arith.constant 0 : index
    %c0_59 = arith.constant 0 : index
    %69 = vector.load %arg3[%c7, %c0_58, %c0_59] : memref<9x4x4xbf16, #tpu.memory_space<vmem>>, vector<1x4x4xbf16>
    %70 = vector.shape_cast %69 : vector<1x4x4xbf16> to vector<4x4xbf16>
    %cst_60 = arith.constant dense<0.000000e+00> : vector<32x4xf32>
    %71 = tpu.matmul %68, %70, %cst_60 {dimension_numbers = #tpu.dot_dimension_numbers<[1], [0], [0], [1], [0, 0, 1, 1], [], []>} : vector<32x4xbf16>, vector<4x4xbf16>, vector<32x4xf32> -> vector<32x4xf32>
    %72 = arith.addf %63, %71 : vector<32x4xf32>
    %c1_i32_61 = arith.constant 1 : i32
    %73 = arith.addi %1, %c1_i32_61 : i32
    %c0_62 = arith.constant 0 : index
    %c0_63 = arith.constant 0 : index
    %74 = arith.index_cast %73 : i32 to index
    %c1_64 = arith.constant 1 : index
    %c0_65 = arith.constant 0 : index
    %75 = vector.load %arg2[%c0_62, %c0_63, %74, %c1_64, %c0_65] : memref<1x4x9x9x4xbf16, #tpu.memory_space<vmem>>, vector<1x1x4x8x4xbf16>
    %76 = vector.shape_cast %75 : vector<1x1x4x8x4xbf16> to vector<4x8x4xbf16>
    %77 = vector.shape_cast %76 : vector<4x8x4xbf16> to vector<32x4xbf16>
    %c8 = arith.constant 8 : index
    %c0_66 = arith.constant 0 : index
    %c0_67 = arith.constant 0 : index
    %78 = vector.load %arg3[%c8, %c0_66, %c0_67] : memref<9x4x4xbf16, #tpu.memory_space<vmem>>, vector<1x4x4xbf16>
    %79 = vector.shape_cast %78 : vector<1x4x4xbf16> to vector<4x4xbf16>
    %cst_68 = arith.constant dense<0.000000e+00> : vector<32x4xf32>
    %80 = tpu.matmul %77, %79, %cst_68 {dimension_numbers = #tpu.dot_dimension_numbers<[1], [0], [0], [1], [0, 0, 1, 1], [], []>} : vector<32x4xbf16>, vector<4x4xbf16>, vector<32x4xf32> -> vector<32x4xf32>
    %81 = arith.addf %72, %80 : vector<32x4xf32>
    %c0_69 = arith.constant 0 : index
    %c0_70 = arith.constant 0 : index
    %82 = vector.load %arg4[%c0_69, %c0_70] : memref<1x4xf32, #tpu.memory_space<vmem>>, vector<1x4xf32>
    %83 = vector.broadcast %82 : vector<1x4xf32> to vector<32x4xf32>
    %84 = arith.addf %81, %83 : vector<32x4xf32>
    %85 = vector.shape_cast %84 : vector<32x4xf32> to vector<4x8x4xf32>
    %c0_71 = arith.constant 0 : index
    %c0_72 = arith.constant 0 : index
    %c0_73 = arith.constant 0 : index
    %c0_74 = arith.constant 0 : index
    %86 = vector.load %arg5[%c0_71, %c0_72, %c0_73, %c0_74] : memref<1x4x8x4xf32, #tpu.memory_space<vmem>>, vector<1x4x8x4xf32>
    %87 = vector.shape_cast %86 : vector<1x4x8x4xf32> to vector<4x8x4xf32>
    %88 = vector.shape_cast %85 : vector<4x8x4xf32> to vector<1x4x8x4xf32>
    tpu.vector_store %arg5[%c0_71, %c0_72, %c0_73, %c0_74], %88 {strides = array<i32>} : memref<1x4x8x4xf32, #tpu.memory_space<vmem>>, vector<1x4x8x4xf32>,
    return
  }
  func.func @transform_0(%arg0: i32, %arg1: i32) -> (i32, i32, i32, i32, i32) {
    %c0_i32 = arith.constant 0 : i32
    %c0_i32_0 = arith.constant 0 : i32
    %c0_i32_1 = arith.constant 0 : i32
    %c0_i32_2 = arith.constant 0 : i32
    %c0_i32_3 = arith.constant 0 : i32
    return %arg0, %c0_i32, %c0_i32_0, %c0_i32_1, %c0_i32_2 : i32, i32, i32, i32, i32
  }
  func.func @transform_1(%arg0: i32, %arg1: i32) -> (i32, i32, i32) {
    %c0_i32 = arith.constant 0 : i32
    %c0_i32_0 = arith.constant 0 : i32
    %c0_i32_1 = arith.constant 0 : i32
    %c0_i32_2 = arith.constant 0 : i32
    return %c0_i32, %c0_i32_0, %c0_i32_1 : i32, i32, i32
  }
  func.func @transform_2(%arg0: i32, %arg1: i32) -> (i32, i32) {
    %c0_i32 = arith.constant 0 : i32
    %c0_i32_0 = arith.constant 0 : i32
    %c0_i32_1 = arith.constant 0 : i32
    return %c0_i32, %c0_i32_0 : i32, i32
  }
  func.func @transform_3(%arg0: i32, %arg1: i32) -> (i32, i32, i32, i32) {
    %c0_i32 = arith.constant 0 : i32
    %c0_i32_0 = arith.constant 0 : i32
    %c0_i32_1 = arith.constant 0 : i32
    return %arg0, %arg1, %c0_i32, %c0_i32_0 : i32, i32, i32, i32
  }
}

</mosaic_0001>

<llo_original>
// kernel: downsample.1
$region0: #{downsample.1}
  #allocation0 [shape = 'u32[]', space=smem, size = 0x4, offset = 0x4, fixed_abs, tag = 'smem constant byte address 0x4 - core index']
  #allocation1 [shape = 'u32[144,128]{1,0:T(1,128)}', space=vmem, size = 0x12000, scoped, tag = 'internal scratch']
  %s0 = inlined_call_operand.vmem [shape: bf16[2,4,9,9,4], index: 0, kind: input, shape index: {}]
  %s1 = inlined_call_operand.vmem [shape: bf16[9,4,4], index: 1, kind: input, shape index: {}]
  %s2 = inlined_call_operand.vmem [shape: f32[1,4], index: 2, kind: input, shape index: {}]
  %s3 = inlined_call_operand.vmem [shape: f32[2,8,8,4], index: 3, kind: output, shape index: {}]
  %s4 = sld [smem:[#allocation0]]
  $region45: #{downsample.1} parent=0
    _
  %s6 = ssub.s32 1, %s4
  %s7 = scalar_select 0, %s6, %s4
  loop: start=0, step=1, limit=6
  $region2: #{downsample.1} parent=0 // loop_pre_header
    _
  $region3: #{downsample.1} parent=0 // loop_header
    %s9 = sphi 0, %s13
    %p10 = scmp.ge.s32.totalorder %s9, 6
    %s16 = sphi 0, %s28
    %s17 = sphi 0, %s24
    %s18 = sphi 0, %s16
    %s19 = sphi 0, %s17
    %s20 = sphi 0, %s18
    %s21 = sphi 0, %s19
    %s31 = sphi 0, %s33
    %s34 = sphi 0, %s31
    %s35 = sphi 0, %s34
    %s51 = sphi 0, %s35
    %s55 = sphi 0, %s55
    %s57 = sphi 0, %s55
    %s58 = sphi 0, %s57
    %s72 = sphi 0, %s58
    %s76 = sphi 0, %s76
    %s78 = sphi 0, %s76
    %s79 = sphi 0, %s78
    %s93 = sphi 0, %s79
    %s101 = sphi 0, %s103
    %s104 = sphi 0, %s101
    %s105 = sphi 0, %s104
    %s121 = sphi 0, %s105
  $region4: #{downsample.1} parent=0 // loop_header_branch
    %12 = sbr.rel (%p10) target = $region8
  $region5: #{downsample.1} parent=0 // loop_body
    %s14 = ssub.s32 %s9, 1
    %s15 = ssub.s32 %s9, 2
    %s22 = sadd.s32 1, %s17
    %p23 = scmp.ge.s32.totalorder %s22, 2
    %s24 = scalar_select %p23, 0, %s22
    %s25 = sadd.s32 1, %s16
    %s26 = scalar_select %p23, %s25, %s16
    %p27 = scmp.ge.s32.totalorder %s26, 2
    %s28 = scalar_select %p27, 0, %s26
    %s29 = ssub.s32 %s16, %s28
    %p30 = scmp.eq.s32.totalorder %s29, 0
    %s32 = sadd.s32 %s31, 1
    %s33 = scalar_select %p30, %s31, %s32
    %p36 = pneg %p30
    %p37 = scmp.eq.s32.totalorder %s9, 3
    %p38 = por %p36, %p37
    %p39 = scmp.ne.s32.totalorder %s31, %s34
    %p40 = scmp.eq.s32.totalorder %s9, 0
    %p41 = por %p39, %p40
    %p42 = scmp.ne.s32.totalorder %s31, %s34
    %p43 = scmp.eq.s32.totalorder %s14, 3
    %p44 = por %p42, %p43
    %p45 = scmp.ne.s32.totalorder %s34, %s35
    %p46 = scmp.eq.s32.totalorder %s14, 0
    %p47 = por %p45, %p46
    %p48 = scmp.ne.s32.totalorder %s34, %s35
    %p49 = scmp.eq.s32.totalorder %s15, 3
    %p50 = por %p48, %p49
    %p52 = scmp.ne.s32.totalorder %s35, %s51
    %p53 = scmp.eq.s32.totalorder %s15, 0
    %p54 = por %p52, %p53
    %s56 = sadd.s32 %s55, 1
    %p59 = scmp.eq.s32.totalorder %s9, 3
    %p60 = scmp.ne.s32.totalorder %s55, %s57
    %p61 = scmp.eq.s32.totalorder %s9, 0
    %p62 = por %p60, %p61
    %p63 = scmp.ne.s32.totalorder %s55, %s57
    %p64 = scmp.eq.s32.totalorder %s14, 3
    %p65 = por %p63, %p64
    %p66 = scmp.ne.s32.totalorder %s57, %s58
    %p67 = scmp.eq.s32.totalorder %s14, 0
    %p68 = por %p66, %p67
    %p69 = scmp.ne.s32.totalorder %s57, %s58
    %p70 = scmp.eq.s32.totalorder %s15, 3
    %p71 = por %p69, %p70
    %p73 = scmp.ne.s32.totalorder %s58, %s72
    %p74 = scmp.eq.s32.totalorder %s15, 0
    %p75 = por %p73, %p74
    %s77 = sadd.s32 %s76, 1
    %p80 = scmp.eq.s32.totalorder %s9, 3
    %p81 = scmp.ne.s32.totalorder %s76, %s78
    %p82 = scmp.eq.s32.totalorder %s9, 0
    %p83 = por %p81, %p82
    %p84 = scmp.ne.s32.totalorder %s76, %s78
    %p85 = scmp.eq.s32.totalorder %s14, 3
    %p86 = por %p84, %p85
    %p87 = scmp.ne.s32.totalorder %s78, %s79
    %p88 = scmp.eq.s32.totalorder %s14, 0
    %p89 = por %p87, %p88
    %p90 = scmp.ne.s32.totalorder %s78, %s79
    %p91 = scmp.eq.s32.totalorder %s15, 3
    %p92 = por %p90, %p91
    %p94 = scmp.ne.s32.totalorder %s79, %s93
    %p95 = scmp.eq.s32.totalorder %s15, 0
    %p96 = por %p94, %p95
    %s97 = ssub.s32 %s16, %s28
    %s98 = ssub.s32 %s17, %s24
    %s99 = sor.u32 %s97, %s98
    %p100 = scmp.eq.s32.totalorder %s99, 0
    %s102 = sadd.s32 %s101, 1
    %s103 = scalar_select %p100, %s101, %s102
    %p106 = pneg %p100
    %p107 = scmp.eq.s32.totalorder %s9, 3
    %p108 = por %p106, %p107
    %p109 = scmp.ne.s32.totalorder %s101, %s104
    %p110 = scmp.eq.s32.totalorder %s9, 0
    %p111 = por %p109, %p110
    %p112 = scmp.ne.s32.totalorder %s101, %s104
    %p113 = scmp.eq.s32.totalorder %s14, 3
    %p114 = por %p112, %p113
    %p115 = scmp.ne.s32.totalorder %s104, %s105
    %p116 = scmp.eq.s32.totalorder %s14, 0
    %p117 = por %p115, %p116
    %p118 = scmp.ne.s32.totalorder %s104, %s105
    %p119 = scmp.eq.s32.totalorder %s15, 3
    %p120 = por %p118, %p119
    %p122 = scmp.ne.s32.totalorder %s105, %s121
    %p123 = scmp.eq.s32.totalorder %s15, 0
    %p124 = por %p122, %p123
    %p125 = scmp.le.s32.totalorder 1, %s9
    %p126 = scmp.lt.s32.totalorder %s9, 5
    %p127 = pnand %p125, %p126
    %p128 = pneg %p127
    // Predicated region
    $region9: #{downsample.1} parent=5 // pred_check
      _
    $region10: #{downsample.1} parent=5 // pred_check_branch
      %130 = sbr.rel (%p127) target = $region12
    $region11: #{downsample.1} parent=5 // pred_region
      %s131 = ssub.s32 %s9, 1
      // Predicated region
      $region13: #{downsample.1} parent=11 // pred_check
        %p132 = pneg %p68
      $region14: #{downsample.1} parent=11 // pred_check_branch
        %134 = sbr.rel (%p132) target = $region16
      $region15: #{downsample.1} parent=11 // pred_region
        _
      $region16: #{downsample.1} parent=11 // pred_fallthru
        _
      // Predicated region
      $region17: #{downsample.1} parent=11 // pred_check
        %p135 = pneg %p89
      $region18: #{downsample.1} parent=11 // pred_check_branch
        %137 = sbr.rel (%p135) target = $region20
      $region19: #{downsample.1} parent=11 // pred_region
        _
      $region20: #{downsample.1} parent=11 // pred_fallthru
        _
    $region12: #{downsample.1} parent=5 // pred_fallthru
      _
    %p138 = scmp.lt.s32.totalorder %s9, 4
    // Predicated region
    $region21: #{downsample.1} parent=5 // pred_check
      %p139 = pneg %p138
    $region22: #{downsample.1} parent=5 // pred_check_branch
      %141 = sbr.rel (%p139) target = $region24
    $region23: #{downsample.1} parent=5 // pred_region
      // Predicated region
      $region25: #{downsample.1} parent=23 // pred_check
        %p142 = pneg %p41
      $region26: #{downsample.1} parent=23 // pred_check_branch
        %144 = sbr.rel (%p142) target = $region28
      $region27: #{downsample.1} parent=23 // pred_region
        %p145 = scmp.lt.s32.totalorder %s16, 1
        %s146 = scalar_select %p145, %s16, 1
        %s147 = smul.addr %s146, 72
        %s148 = smul.addr %s147, 4
        %s149 = scalar_lea.vmem %s0, %s148
      $region28: #{downsample.1} parent=23 // pred_fallthru
        _
    $region24: #{downsample.1} parent=5 // pred_fallthru
      _
    %p150 = scmp.le.s32.totalorder 1, %s9
    %p151 = scmp.lt.s32.totalorder %s9, 5
    %p152 = pnand %p150, %p151
    %p153 = pneg %p152
    // Predicated region
    $region29: #{downsample.1} parent=5 // pred_check
      _
    $region30: #{downsample.1} parent=5 // pred_check_branch
      %155 = sbr.rel (%p152) target = $region32
    $region31: #{downsample.1} parent=5 // pred_region
      %s156 = ssub.s32 %s9, 1
      %p157 = scmp.lt.s32.totalorder %s18, 1
      %s158 = scalar_select %p157, %s18, 1
      %s159 = smul.addr %s158, 72
      %s160 = smul.addr %s159, 4
      %s161 = scalar_lea.vmem %s0, %s160
      %p162 = pneg %p47
      %p163 = pneg %p44
      %p164 = pneg %p68
      %p165 = pneg %p65
      %p166 = pneg %p89
      %p167 = pneg %p86
      %p168 = pneg %p117
      %p169 = pneg %p114
      %s170 = smul.u32 4, %s19
      %p171 = scmp.lt.s32.totalorder %s18, 1
      %s172 = scalar_select %p171, %s18, 1
      %p173 = scmp.lt.s32.totalorder %s170, 7
      %s174 = scalar_select %p173, %s170, 7
      %s175 = smul.addr %s172, 8
      %s176 = sadd.s32 %s174, %s175
      %s177 = smul.addr %s176, 8
      %s178 = scalar_lea.vmem %s3, %s177
      %p179 = scmp.lt.s32.totalorder %s18, 1
      %s180 = scalar_select %p179, %s18, 1
      %s181 = smul.addr %s180, 72
      %s182 = smul.addr %s181, 4
      %s183 = scalar_lea.vmem %s0, %s182
      %s184 = smul.u32 4, %s19
      %p185 = scmp.lt.s32.totalorder %s18, 1
      %s186 = scalar_select %p185, %s18, 1
      %p187 = scmp.lt.s32.totalorder %s184, 7
      %s188 = scalar_select %p187, %s184, 7
      %s189 = smul.addr %s186, 8
      %s190 = sadd.s32 %s188, %s189
      %s191 = smul.addr %s190, 8
      %s192 = scalar_lea.vmem %s3, %s191
      %s193 = smul.u32 4, %s19
      %s195 = smul.u32 %s19, 4
      %s196 = smul.u32 %s195, 2
      %s197 = smul.addr %s196, 4
      %s198 = scalar_lea.vmem %s183, %s197
      %v199 = vld [vmem:[%s198] sm:$0xf]
      %v200 = vld [vmem:[%s198 + $0x8] sm:$0xf]
      %v201 = vld [vmem:[%s198 + $0x10] sm:$0xf]
      %v202 = vld [vmem:[%s198 + $0x18] sm:$0xf]
      %v203 = vld [vmem:[%s1] sm:$0x3]
      %s204 = sadd.s32 %s196, 18
      %s205 = smul.addr %s204, 4
      %s206 = scalar_lea.vmem %s183, %s205
      %v207 = vld [vmem:[%s206] sm:$0xf]
      %v208 = vld [vmem:[%s206 + $0x8] sm:$0xf]
      %v209 = vld [vmem:[%s206 + $0x10] sm:$0xf]
      %v210 = vld [vmem:[%s206 + $0x18] sm:$0xf]
      %s211 = scalar_lea.vmem %s1, 2
      %v212 = vld [vmem:[%s211] sm:$0x3]
      %v217 = vunpack.c.l.b16 %v207
      %v218 = vunpack.c.l.b16 %v208
      %v219 = vunpack.c.l.b16 %v209
      %v220 = vunpack.c.l.b16 %v210
      %v221 = vpack.c.b16 %v218, %v217
      %v222 = vpack.c.b16 %v220, %v219
      %vm223 = vcmask 31744
      %v225 = vsel %vm223, %v221, 0
      %v228 = vsel %vm223, %v222, 0
      %vm230 = vcmask 1041408
      %v232 = vsel %vm230, %v212, 0
      %234 = vmatprep.subr.bf16.mxu0 0
      %235 = vmatpush1.bf16.msra.mxu0 %v232
      %236 = vmatprep.subr.bf16.mxu0 0
      %237 = vmatpush1.bf16.msra.mxu0 0
      %238 = vmatprep.subr.bf16.mxu0 0
      %239 = vmatpush1.bf16.msra.mxu0 0
      %240 = vmatprep.subr.bf16.mxu0 0
      %241 = vmatpush1.bf16.msra.mxu0 0
      %242 = vmatprep.subr.bf16.mxu0 0
      %243 = vmatpush1.bf16.msra.mxu0 0
      %244 = vmatprep.subr.bf16.mxu0 0
      %245 = vmatpush1.bf16.msra.mxu0 0
      %246 = vmatprep.subr.bf16.mxu0 0
      %247 = vmatpush1.bf16.msra.mxu0 0
      %248 = vmatprep.subr.bf16.mxu0 0
      %249 = vmatpush1.bf16.msra.mxu0 0
      %250 = vmatprep.subr.bf16.mxu0 0
      %251 = vmatpush1.bf16.msra.mxu0 0
      %252 = vmatprep.subr.bf16.mxu0 0
      %253 = vmatpush1.bf16.msra.mxu0 0
      %254 = vmatprep.subr.bf16.mxu0 0
      %255 = vmatpush1.bf16.msra.mxu0 0
      %256 = vmatprep.subr.bf16.mxu0 0
      %257 = vmatpush1.bf16.msra.mxu0 0
      %258 = vmatprep.subr.bf16.mxu0 0
      %259 = vmatpush1.bf16.msra.mxu0 0
      %260 = vmatprep.subr.bf16.mxu0 0
      %261 = vmatpush1.bf16.msra.mxu0 0
      %262 = vmatprep.subr.bf16.mxu0 0
      %263 = vmatpush1.bf16.msra.mxu0 0
      %264 = vmatprep.subr.bf16.mxu0 0
      %265 = vmatpush1.bf16.msra.mxu0 0
      %266 = vmatprep.mubr.bf16.mxu0 0
      %267 = vmatmul.mubr.bf16.gmra.mrb[0].mxu0 %v225
      %v268 = vpop.f32.mrb[0].mxu0
      %v269 = vadd.f32 0.0, %v268
      %v270 = vpop.f32.mrb[0].mxu0
      %v271 = vpop.f32.mrb[0].mxu0
      %v272 = vadd.f32 0.0, %v271
      %v273 = vpop.f32.mrb[0].mxu0
      %274 = vmatprep.mubr.bf16.mxu0 0
      %275 = vmatmul.mubr.bf16.gmra.mrb[0].mxu0 %v228
      %v276 = vpop.f32.mrb[0].mxu0
      %v277 = vadd.f32 0.0, %v276
      %v278 = vpop.f32.mrb[0].mxu0
      %v279 = vpop.f32.mrb[0].mxu0
      %v280 = vadd.f32 0.0, %v279
      %v281 = vpop.f32.mrb[0].mxu0
      %282 = vdwg.mxu0
      %v287 = vunpack.c.l.b16 %v199
      %v288 = vunpack.c.l.b16 %v200
      %v289 = vunpack.c.l.b16 %v201
      %v290 = vunpack.c.l.b16 %v202
      %v291 = vpack.c.b16 %v288, %v287
      %v292 = vpack.c.b16 %v290, %v289
      %v294 = vsel %vm223, %v291, 0
      %v297 = vsel %vm223, %v292, 0
      %v300 = vsel %vm230, %v203, 0
      %302 = vmatprep.subr.bf16.mxu0 0
      %303 = vmatpush1.bf16.msra.mxu0 %v300
      %304 = vmatprep.subr.bf16.mxu0 0
      %305 = vmatpush1.bf16.msra.mxu0 0
      %306 = vmatprep.subr.bf16.mxu0 0
      %307 = vmatpush1.bf16.msra.mxu0 0
      %308 = vmatprep.subr.bf16.mxu0 0
      %309 = vmatpush1.bf16.msra.mxu0 0
      %310 = vmatprep.subr.bf16.mxu0 0
      %311 = vmatpush1.bf16.msra.mxu0 0
      %312 = vmatprep.subr.bf16.mxu0 0
      %313 = vmatpush1.bf16.msra.mxu0 0
      %314 = vmatprep.subr.bf16.mxu0 0
      %315 = vmatpush1.bf16.msra.mxu0 0
      %316 = vmatprep.subr.bf16.mxu0 0
      %317 = vmatpush1.bf16.msra.mxu0 0
      %318 = vmatprep.subr.bf16.mxu0 0
      %319 = vmatpush1.bf16.msra.mxu0 0
      %320 = vmatprep.subr.bf16.mxu0 0
      %321 = vmatpush1.bf16.msra.mxu0 0
      %322 = vmatprep.subr.bf16.mxu0 0
      %323 = vmatpush1.bf16.msra.mxu0 0
      %324 = vmatprep.subr.bf16.mxu0 0
      %325 = vmatpush1.bf16.msra.mxu0 0
      %326 = vmatprep.subr.bf16.mxu0 0
      %327 = vmatpush1.bf16.msra.mxu0 0
      %328 = vmatprep.subr.bf16.mxu0 0
      %329 = vmatpush1.bf16.msra.mxu0 0
      %330 = vmatprep.subr.bf16.mxu0 0
      %331 = vmatpush1.bf16.msra.mxu0 0
      %332 = vmatprep.subr.bf16.mxu0 0
      %333 = vmatpush1.bf16.msra.mxu0 0
      %334 = vmatprep.mubr.bf16.mxu0 0
      %335 = vmatmul.mubr.bf16.gmra.mrb[0].mxu0 %v294
      %v336 = vpop.f32.mrb[0].mxu0
      %v337 = vadd.f32 %v269, %v336
      %v338 = vpop.f32.mrb[0].mxu0
      %v339 = vpop.f32.mrb[0].mxu0
      %v340 = vadd.f32 %v272, %v339
      %v341 = vpop.f32.mrb[0].mxu0
      %342 = vmatprep.mubr.bf16.mxu0 0
      %343 = vmatmul.mubr.bf16.gmra.mrb[0].mxu0 %v297
      %v344 = vpop.f32.mrb[0].mxu0
      %v345 = vadd.f32 %v277, %v344
      %v346 = vpop.f32.mrb[0].mxu0
      %v347 = vpop.f32.mrb[0].mxu0
      %v348 = vadd.f32 %v280, %v347
      %v349 = vpop.f32.mrb[0].mxu0
      %350 = vdwg.mxu0
      %v351 = vld [vmem:[%s198] sm:$0xf]
      %v352 = vld [vmem:[%s198 + $0x4] sm:$0x1]
      %v353 = vld [vmem:[%s198 + $0x8] sm:$0xf]
      %v354 = vld [vmem:[%s198 + $0xc] sm:$0x1]
      %v355 = vld [vmem:[%s198 + $0x10] sm:$0xf]
      %v356 = vld [vmem:[%s198 + $0x14] sm:$0x1]
      %v357 = vld [vmem:[%s198 + $0x18] sm:$0xf]
      %v358 = vld [vmem:[%s198 + $0x1c] sm:$0x1]
      %vm359 = vsmask.f32 3328
      %vm360 = vsmask.f32 7440
      %vm361 = vmor %vm359, %vm360
      %v363 = vshrl.u32 %v351, 16
      %v365 = vrot.slane %v363, 4
      %v366 = vshll.u32 %v351, 16
      %v368 = vrot.slane %v366, 5
      %v369 = vor.u32 %v365, %v368
      %v370 = vrot.slane %v369, 4
      %v372 = vshll.u32 %v352, 16
      %v374 = vrot.slane %v372, 5
      %v375 = vsel %vm361, %v370, %v374
      %v377 = vshrl.u32 %v353, 16
      %v379 = vrot.slane %v377, 4
      %v380 = vshll.u32 %v353, 16
      %v382 = vrot.slane %v380, 5
      %v383 = vor.u32 %v379, %v382
      %v384 = vrot.slane %v383, 4
      %v386 = vshll.u32 %v354, 16
      %v388 = vrot.slane %v386, 5
      %v389 = vsel %vm361, %v384, %v388
      %v391 = vshrl.u32 %v355, 16
      %v393 = vrot.slane %v391, 4
      %v394 = vshll.u32 %v355, 16
      %v396 = vrot.slane %v394, 5
      %v397 = vor.u32 %v393, %v396
      %v398 = vrot.slane %v397, 4
      %v400 = vshll.u32 %v356, 16
      %v402 = vrot.slane %v400, 5
      %v403 = vsel %vm361, %v398, %v402
      %v405 = vshrl.u32 %v357, 16
      %v407 = vrot.slane %v405, 4
      %v408 = vshll.u32 %v357, 16
      %v410 = vrot.slane %v408, 5
      %v411 = vor.u32 %v407, %v410
      %v412 = vrot.slane %v411, 4
      %v414 = vshll.u32 %v358, 16
      %v416 = vrot.slane %v414, 5
      %v417 = vsel %vm361, %v412, %v416
      %s418 = scalar_lea.vmem %s1, 4
      %v419 = vld [vmem:[%s418] sm:$0x3]
      %v420 = vunpack.c.l.b16 %v375
      %v421 = vunpack.c.l.b16 %v389
      %v422 = vunpack.c.l.b16 %v403
      %v423 = vunpack.c.l.b16 %v417
      %v424 = vpack.c.b16 %v421, %v420
      %v425 = vpack.c.b16 %v423, %v422
      %v427 = vsel %vm223, %v424, 0
      %v430 = vsel %vm223, %v425, 0
      %v433 = vsel %vm230, %v419, 0
      %435 = vmatprep.subr.bf16.mxu0 0
      %436 = vmatpush1.bf16.msra.mxu0 %v433
      %437 = vmatprep.subr.bf16.mxu0 0
      %438 = vmatpush1.bf16.msra.mxu0 0
      %439 = vmatprep.subr.bf16.mxu0 0
      %440 = vmatpush1.bf16.msra.mxu0 0
      %441 = vmatprep.subr.bf16.mxu0 0
      %442 = vmatpush1.bf16.msra.mxu0 0
      %443 = vmatprep.subr.bf16.mxu0 0
      %444 = vmatpush1.bf16.msra.mxu0 0
      %445 = vmatprep.subr.bf16.mxu0 0
      %446 = vmatpush1.bf16.msra.mxu0 0
      %447 = vmatprep.subr.bf16.mxu0 0
      %448 = vmatpush1.bf16.msra.mxu0 0
      %449 = vmatprep.subr.bf16.mxu0 0
      %450 = vmatpush1.bf16.msra.mxu0 0
      %451 = vmatprep.subr.bf16.mxu0 0
      %452 = vmatpush1.bf16.msra.mxu0 0
      %453 = vmatprep.subr.bf16.mxu0 0
      %454 = vmatpush1.bf16.msra.mxu0 0
      %455 = vmatprep.subr.bf16.mxu0 0
      %456 = vmatpush1.bf16.msra.mxu0 0
      %457 = vmatprep.subr.bf16.mxu0 0
      %458 = vmatpush1.bf16.msra.mxu0 0
      %459 = vmatprep.subr.bf16.mxu0 0
      %460 = vmatpush1.bf16.msra.mxu0 0
      %461 = vmatprep.subr.bf16.mxu0 0
      %462 = vmatpush1.bf16.msra.mxu0 0
      %463 = vmatprep.subr.bf16.mxu0 0
      %464 = vmatpush1.bf16.msra.mxu0 0
      %465 = vmatprep.subr.bf16.mxu0 0
      %466 = vmatpush1.bf16.msra.mxu0 0
      %467 = vmatprep.mubr.bf16.mxu0 0
      %468 = vmatmul.mubr.bf16.gmra.mrb[0].mxu0 %v427
      %v469 = vpop.f32.mrb[0].mxu0
      %v470 = vadd.f32 0.0, %v469
      %v471 = vpop.f32.mrb[0].mxu0
      %v472 = vpop.f32.mrb[0].mxu0
      %v473 = vadd.f32 0.0, %v472
      %v474 = vpop.f32.mrb[0].mxu0
      %475 = vmatprep.mubr.bf16.mxu0 0
      %476 = vmatmul.mubr.bf16.gmra.mrb[0].mxu0 %v430
      %v477 = vpop.f32.mrb[0].mxu0
      %v478 = vadd.f32 0.0, %v477
      %v479 = vpop.f32.mrb[0].mxu0
      %v480 = vpop.f32.mrb[0].mxu0
      %v481 = vadd.f32 0.0, %v480
      %v482 = vpop.f32.mrb[0].mxu0
      %483 = vdwg.mxu0
      %v484 = vadd.f32 %v337, %v470
      %v485 = vadd.f32 %v340, %v473
      %v486 = vadd.f32 %v345, %v478
      %v487 = vadd.f32 %v348, %v481
      %s488 = sadd.s32 %s196, 36
      %s489 = smul.addr %s488, 4
      %s490 = scalar_lea.vmem %s183, %s489
      %v491 = vld [vmem:[%s490] sm:$0xf]
      %v492 = vld [vmem:[%s490 + $0x8] sm:$0xf]
      %v493 = vld [vmem:[%s490 + $0x10] sm:$0xf]
      %v494 = vld [vmem:[%s490 + $0x18] sm:$0xf]
      %s495 = scalar_lea.vmem %s1, 6
      %v496 = vld [vmem:[%s495] sm:$0x3]
      %v501 = vunpack.c.l.b16 %v491
      %v502 = vunpack.c.l.b16 %v492
      %v503 = vunpack.c.l.b16 %v493
      %v504 = vunpack.c.l.b16 %v494
      %v505 = vpack.c.b16 %v502, %v501
      %v506 = vpack.c.b16 %v504, %v503
      %v508 = vsel %vm223, %v505, 0
      %v511 = vsel %vm223, %v506, 0
      %v514 = vsel %vm230, %v496, 0
      %516 = vmatprep.subr.bf16.mxu0 0
      %517 = vmatpush1.bf16.msra.mxu0 %v514
      %518 = vmatprep.subr.bf16.mxu0 0
      %519 = vmatpush1.bf16.msra.mxu0 0
      %520 = vmatprep.subr.bf16.mxu0 0
      %521 = vmatpush1.bf16.msra.mxu0 0
      %522 = vmatprep.subr.bf16.mxu0 0
      %523 = vmatpush1.bf16.msra.mxu0 0
      %524 = vmatprep.subr.bf16.mxu0 0
      %525 = vmatpush1.bf16.msra.mxu0 0
      %526 = vmatprep.subr.bf16.mxu0 0
      %527 = vmatpush1.bf16.msra.mxu0 0
      %528 = vmatprep.subr.bf16.mxu0 0
      %529 = vmatpush1.bf16.msra.mxu0 0
      %530 = vmatprep.subr.bf16.mxu0 0
      %531 = vmatpush1.bf16.msra.mxu0 0
      %532 = vmatprep.subr.bf16.mxu0 0
      %533 = vmatpush1.bf16.msra.mxu0 0
      %534 = vmatprep.subr.bf16.mxu0 0
      %535 = vmatpush1.bf16.msra.mxu0 0
      %536 = vmatprep.subr.bf16.mxu0 0
      %537 = vmatpush1.bf16.msra.mxu0 0
      %538 = vmatprep.subr.bf16.mxu0 0
      %539 = vmatpush1.bf16.msra.mxu0 0
      %540 = vmatprep.subr.bf16.mxu0 0
      %541 = vmatpush1.bf16.msra.mxu0 0
      %542 = vmatprep.subr.bf16.mxu0 0
      %543 = vmatpush1.bf16.msra.mxu0 0
      %544 = vmatprep.subr.bf16.mxu0 0
      %545 = vmatpush1.bf16.msra.mxu0 0
      %546 = vmatprep.subr.bf16.mxu0 0
      %547 = vmatpush1.bf16.msra.mxu0 0
      %548 = vmatprep.mubr.bf16.mxu0 0
      %549 = vmatmul.mubr.bf16.gmra.mrb[0].mxu0 %v508
      %v550 = vpop.f32.mrb[0].mxu0
      %v551 = vadd.f32 0.0, %v550
      %v552 = vpop.f32.mrb[0].mxu0
      %v553 = vpop.f32.mrb[0].mxu0
      %v554 = vadd.f32 0.0, %v553
      %v555 = vpop.f32.mrb[0].mxu0
      %556 = vmatprep.mubr.bf16.mxu0 0
      %557 = vmatmul.mubr.bf16.gmra.mrb[0].mxu0 %v511
      %v558 = vpop.f32.mrb[0].mxu0
      %v559 = vadd.f32 0.0, %v558
      %v560 = vpop.f32.mrb[0].mxu0
      %v561 = vpop.f32.mrb[0].mxu0
      %v562 = vadd.f32 0.0, %v561
      %v563 = vpop.f32.mrb[0].mxu0
      %564 = vdwg.mxu0
      %v565 = vadd.f32 %v484, %v551
      %v566 = vadd.f32 %v485, %v554
      %v567 = vadd.f32 %v486, %v559
      %v568 = vadd.f32 %v487, %v562
      %s569 = sadd.s32 %s196, 54
      %s570 = smul.addr %s569, 4
      %s571 = scalar_lea.vmem %s183, %s570
      %v572 = vld [vmem:[%s571] sm:$0xf]
      %v573 = vld [vmem:[%s571 + $0x8] sm:$0xf]
      %v574 = vld [vmem:[%s571 + $0x10] sm:$0xf]
      %v575 = vld [vmem:[%s571 + $0x18] sm:$0xf]
      %s576 = scalar_lea.vmem %s1, 8
      %v577 = vld [vmem:[%s576] sm:$0x3]
      %v582 = vunpack.c.l.b16 %v572
      %v583 = vunpack.c.l.b16 %v573
      %v584 = vunpack.c.l.b16 %v574
      %v585 = vunpack.c.l.b16 %v575
      %v586 = vpack.c.b16 %v583, %v582
      %v587 = vpack.c.b16 %v585, %v584
      %v589 = vsel %vm223, %v586, 0
      %v592 = vsel %vm223, %v587, 0
      %v595 = vsel %vm230, %v577, 0
      %597 = vmatprep.subr.bf16.mxu0 0
      %598 = vmatpush1.bf16.msra.mxu0 %v595
      %599 = vmatprep.subr.bf16.mxu0 0
      %600 = vmatpush1.bf16.msra.mxu0 0
      %601 = vmatprep.subr.bf16.mxu0 0
      %602 = vmatpush1.bf16.msra.mxu0 0
      %603 = vmatprep.subr.bf16.mxu0 0
      %604 = vmatpush1.bf16.msra.mxu0 0
      %605 = vmatprep.subr.bf16.mxu0 0
      %606 = vmatpush1.bf16.msra.mxu0 0
      %607 = vmatprep.subr.bf16.mxu0 0
      %608 = vmatpush1.bf16.msra.mxu0 0
      %609 = vmatprep.subr.bf16.mxu0 0
      %610 = vmatpush1.bf16.msra.mxu0 0
      %611 = vmatprep.subr.bf16.mxu0 0
      %612 = vmatpush1.bf16.msra.mxu0 0
      %613 = vmatprep.subr.bf16.mxu0 0
      %614 = vmatpush1.bf16.msra.mxu0 0
      %615 = vmatprep.subr.bf16.mxu0 0
      %616 = vmatpush1.bf16.msra.mxu0 0
      %617 = vmatprep.subr.bf16.mxu0 0
      %618 = vmatpush1.bf16.msra.mxu0 0
      %619 = vmatprep.subr.bf16.mxu0 0
      %620 = vmatpush1.bf16.msra.mxu0 0
      %621 = vmatprep.subr.bf16.mxu0 0
      %622 = vmatpush1.bf16.msra.mxu0 0
      %623 = vmatprep.subr.bf16.mxu0 0
      %624 = vmatpush1.bf16.msra.mxu0 0
      %625 = vmatprep.subr.bf16.mxu0 0
      %626 = vmatpush1.bf16.msra.mxu0 0
      %627 = vmatprep.subr.bf16.mxu0 0
      %628 = vmatpush1.bf16.msra.mxu0 0
      %629 = vmatprep.mubr.bf16.mxu0 0
      %630 = vmatmul.mubr.bf16.gmra.mrb[0].mxu0 %v589
      %v631 = vpop.f32.mrb[0].mxu0
      %v632 = vadd.f32 0.0, %v631
      %v633 = vpop.f32.mrb[0].mxu0
      %v634 = vpop.f32.mrb[0].mxu0
      %v635 = vadd.f32 0.0, %v634
      %v636 = vpop.f32.mrb[0].mxu0
      %637 = vmatprep.mubr.bf16.mxu0 0
      %638 = vmatmul.mubr.bf16.gmra.mrb[0].mxu0 %v592
      %v639 = vpop.f32.mrb[0].mxu0
      %v640 = vadd.f32 0.0, %v639
      %v641 = vpop.f32.mrb[0].mxu0
      %v642 = vpop.f32.mrb[0].mxu0
      %v643 = vadd.f32 0.0, %v642
      %v644 = vpop.f32.mrb[0].mxu0
      %645 = vdwg.mxu0
      %v646 = vadd.f32 %v565, %v632
      %v647 = vadd.f32 %v566, %v635
      %v648 = vadd.f32 %v567, %v640
      %v649 = vadd.f32 %v568, %v643
      %v650 = vld [vmem:[%s490] sm:$0xf]
      %v651 = vld [vmem:[%s490 + $0x4] sm:$0x1]
      %v652 = vld [vmem:[%s490 + $0x8] sm:$0xf]
      %v653 = vld [vmem:[%s490 + $0xc] sm:$0x1]
      %v654 = vld [vmem:[%s490 + $0x10] sm:$0xf]
      %v655 = vld [vmem:[%s490 + $0x14] sm:$0x1]
      %v656 = vld [vmem:[%s490 + $0x18] sm:$0xf]
      %v657 = vld [vmem:[%s490 + $0x1c] sm:$0x1]
      %v659 = vshrl.u32 %v650, 16
      %v661 = vrot.slane %v659, 4
      %v662 = vshll.u32 %v650, 16
      %v664 = vrot.slane %v662, 5
      %v665 = vor.u32 %v661, %v664
      %v666 = vrot.slane %v665, 4
      %v668 = vshll.u32 %v651, 16
      %v670 = vrot.slane %v668, 5
      %v671 = vsel %vm361, %v666, %v670
      %v673 = vshrl.u32 %v652, 16
      %v675 = vrot.slane %v673, 4
      %v676 = vshll.u32 %v652, 16
      %v678 = vrot.slane %v676, 5
      %v679 = vor.u32 %v675, %v678
      %v680 = vrot.slane %v679, 4
      %v682 = vshll.u32 %v653, 16
      %v684 = vrot.slane %v682, 5
      %v685 = vsel %vm361, %v680, %v684
      %v687 = vshrl.u32 %v654, 16
      %v689 = vrot.slane %v687, 4
      %v690 = vshll.u32 %v654, 16
      %v692 = vrot.slane %v690, 5
      %v693 = vor.u32 %v689, %v692
      %v694 = vrot.slane %v693, 4
      %v696 = vshll.u32 %v655, 16
      %v698 = vrot.slane %v696, 5
      %v699 = vsel %vm361, %v694, %v698
      %v701 = vshrl.u32 %v656, 16
      %v703 = vrot.slane %v701, 4
      %v704 = vshll.u32 %v656, 16
      %v706 = vrot.slane %v704, 5
      %v707 = vor.u32 %v703, %v706
      %v708 = vrot.slane %v707, 4
      %v710 = vshll.u32 %v657, 16
      %v712 = vrot.slane %v710, 5
      %v713 = vsel %vm361, %v708, %v712
      %s714 = scalar_lea.vmem %s1, 10
      %v715 = vld [vmem:[%s714] sm:$0x3]
      %v716 = vunpack.c.l.b16 %v671
      %v717 = vunpack.c.l.b16 %v685
      %v718 = vunpack.c.l.b16 %v699
      %v719 = vunpack.c.l.b16 %v713
      %v720 = vpack.c.b16 %v717, %v716
      %v721 = vpack.c.b16 %v719, %v718
      %v723 = vsel %vm223, %v720, 0
      %v726 = vsel %vm223, %v721, 0
      %v729 = vsel %vm230, %v715, 0
      %731 = vmatprep.subr.bf16.mxu0 0
      %732 = vmatpush1.bf16.msra.mxu0 %v729
      %733 = vmatprep.subr.bf16.mxu0 0
      %734 = vmatpush1.bf16.msra.mxu0 0
      %735 = vmatprep.subr.bf16.mxu0 0
      %736 = vmatpush1.bf16.msra.mxu0 0
      %737 = vmatprep.subr.bf16.mxu0 0
      %738 = vmatpush1.bf16.msra.mxu0 0
      %739 = vmatprep.subr.bf16.mxu0 0
      %740 = vmatpush1.bf16.msra.mxu0 0
      %741 = vmatprep.subr.bf16.mxu0 0
      %742 = vmatpush1.bf16.msra.mxu0 0
      %743 = vmatprep.subr.bf16.mxu0 0
      %744 = vmatpush1.bf16.msra.mxu0 0
      %745 = vmatprep.subr.bf16.mxu0 0
      %746 = vmatpush1.bf16.msra.mxu0 0
      %747 = vmatprep.subr.bf16.mxu0 0
      %748 = vmatpush1.bf16.msra.mxu0 0
      %749 = vmatprep.subr.bf16.mxu0 0
      %750 = vmatpush1.bf16.msra.mxu0 0
      %751 = vmatprep.subr.bf16.mxu0 0
      %752 = vmatpush1.bf16.msra.mxu0 0
      %753 = vmatprep.subr.bf16.mxu0 0
      %754 = vmatpush1.bf16.msra.mxu0 0
      %755 = vmatprep.subr.bf16.mxu0 0
      %756 = vmatpush1.bf16.msra.mxu0 0
      %757 = vmatprep.subr.bf16.mxu0 0
      %758 = vmatpush1.bf16.msra.mxu0 0
      %759 = vmatprep.subr.bf16.mxu0 0
      %760 = vmatpush1.bf16.msra.mxu0 0
      %761 = vmatprep.subr.bf16.mxu0 0
      %762 = vmatpush1.bf16.msra.mxu0 0
      %763 = vmatprep.mubr.bf16.mxu0 0
      %764 = vmatmul.mubr.bf16.gmra.mrb[0].mxu0 %v723
      %v765 = vpop.f32.mrb[0].mxu0
      %v766 = vadd.f32 0.0, %v765
      %v767 = vpop.f32.mrb[0].mxu0
      %v768 = vpop.f32.mrb[0].mxu0
      %v769 = vadd.f32 0.0, %v768
      %v770 = vpop.f32.mrb[0].mxu0
      %771 = vmatprep.mubr.bf16.mxu0 0
      %772 = vmatmul.mubr.bf16.gmra.mrb[0].mxu0 %v726
      %v773 = vpop.f32.mrb[0].mxu0
      %v774 = vadd.f32 0.0, %v773
      %v775 = vpop.f32.mrb[0].mxu0
      %v776 = vpop.f32.mrb[0].mxu0
      %v777 = vadd.f32 0.0, %v776
      %v778 = vpop.f32.mrb[0].mxu0
      %779 = vdwg.mxu0
      %v780 = vadd.f32 %v646, %v766
      %v781 = vadd.f32 %v647, %v769
      %v782 = vadd.f32 %v648, %v774
      %v783 = vadd.f32 %v649, %v777
      %s784 = sadd.s32 %s195, 1
      %s785 = smul.u32 %s784, 2
      %s786 = smul.addr %s785, 4
      %s787 = scalar_lea.vmem %s183, %s786
      %v788 = vld [vmem:[%s787] sm:$0xf]
      %v789 = vld [vmem:[%s787 + $0x8] sm:$0xf]
      %v790 = vld [vmem:[%s787 + $0x10] sm:$0xf]
      %v791 = vld [vmem:[%s787 + $0x18] sm:$0xf]
      %s792 = scalar_lea.vmem %s1, 12
      %v793 = vld [vmem:[%s792] sm:$0x3]
      %v798 = vunpack.c.l.b16 %v788
      %v799 = vunpack.c.l.b16 %v789
      %v800 = vunpack.c.l.b16 %v790
      %v801 = vunpack.c.l.b16 %v791
      %v802 = vpack.c.b16 %v799, %v798
      %v803 = vpack.c.b16 %v801, %v800
      %v805 = vsel %vm223, %v802, 0
      %v808 = vsel %vm223, %v803, 0
      %v811 = vsel %vm230, %v793, 0
      %813 = vmatprep.subr.bf16.mxu0 0
      %814 = vmatpush1.bf16.msra.mxu0 %v811
      %815 = vmatprep.subr.bf16.mxu0 0
      %816 = vmatpush1.bf16.msra.mxu0 0
      %817 = vmatprep.subr.bf16.mxu0 0
      %818 = vmatpush1.bf16.msra.mxu0 0
      %819 = vmatprep.subr.bf16.mxu0 0
      %820 = vmatpush1.bf16.msra.mxu0 0
      %821 = vmatprep.subr.bf16.mxu0 0
      %822 = vmatpush1.bf16.msra.mxu0 0
      %823 = vmatprep.subr.bf16.mxu0 0
      %824 = vmatpush1.bf16.msra.mxu0 0
      %825 = vmatprep.subr.bf16.mxu0 0
      %826 = vmatpush1.bf16.msra.mxu0 0
      %827 = vmatprep.subr.bf16.mxu0 0
      %828 = vmatpush1.bf16.msra.mxu0 0
      %829 = vmatprep.subr.bf16.mxu0 0
      %830 = vmatpush1.bf16.msra.mxu0 0
      %831 = vmatprep.subr.bf16.mxu0 0
      %832 = vmatpush1.bf16.msra.mxu0 0
      %833 = vmatprep.subr.bf16.mxu0 0
      %834 = vmatpush1.bf16.msra.mxu0 0
      %835 = vmatprep.subr.bf16.mxu0 0
      %836 = vmatpush1.bf16.msra.mxu0 0
      %837 = vmatprep.subr.bf16.mxu0 0
      %838 = vmatpush1.bf16.msra.mxu0 0
      %839 = vmatprep.subr.bf16.mxu0 0
      %840 = vmatpush1.bf16.msra.mxu0 0
      %841 = vmatprep.subr.bf16.mxu0 0
      %842 = vmatpush1.bf16.msra.mxu0 0
      %843 = vmatprep.subr.bf16.mxu0 0
      %844 = vmatpush1.bf16.msra.mxu0 0
      %845 = vmatprep.mubr.bf16.mxu0 0
      %846 = vmatmul.mubr.bf16.gmra.mrb[0].mxu0 %v805
      %v847 = vpop.f32.mrb[0].mxu0
      %v848 = vadd.f32 0.0, %v847
      %v849 = vpop.f32.mrb[0].mxu0
      %v850 = vpop.f32.mrb[0].mxu0
      %v851 = vadd.f32 0.0, %v850
      %v852 = vpop.f32.mrb[0].mxu0
      %853 = vmatprep.mubr.bf16.mxu0 0
      %854 = vmatmul.mubr.bf16.gmra.mrb[0].mxu0 %v808
      %v855 = vpop.f32.mrb[0].mxu0
      %v856 = vadd.f32 0.0, %v855
      %v857 = vpop.f32.mrb[0].mxu0
      %v858 = vpop.f32.mrb[0].mxu0
      %v859 = vadd.f32 0.0, %v858
      %v860 = vpop.f32.mrb[0].mxu0
      %861 = vdwg.mxu0
      %v862 = vadd.f32 %v780, %v848
      %v863 = vadd.f32 %v781, %v851
      %v864 = vadd.f32 %v782, %v856
      %v865 = vadd.f32 %v783, %v859
      %s866 = sadd.s32 %s785, 18
      %s867 = smul.addr %s866, 4
      %s868 = scalar_lea.vmem %s183, %s867
      %v869 = vld [vmem:[%s868] sm:$0xf]
      %v870 = vld [vmem:[%s868 + $0x8] sm:$0xf]
      %v871 = vld [vmem:[%s868 + $0x10] sm:$0xf]
      %v872 = vld [vmem:[%s868 + $0x18] sm:$0xf]
      %s873 = scalar_lea.vmem %s1, 14
      %v874 = vld [vmem:[%s873] sm:$0x3]
      %v879 = vunpack.c.l.b16 %v869
      %v880 = vunpack.c.l.b16 %v870
      %v881 = vunpack.c.l.b16 %v871
      %v882 = vunpack.c.l.b16 %v872
      %v883 = vpack.c.b16 %v880, %v879
      %v884 = vpack.c.b16 %v882, %v881
      %v886 = vsel %vm223, %v883, 0
      %v889 = vsel %vm223, %v884, 0
      %v892 = vsel %vm230, %v874, 0
      %894 = vmatprep.subr.bf16.mxu0 0
      %895 = vmatpush1.bf16.msra.mxu0 %v892
      %896 = vmatprep.subr.bf16.mxu0 0
      %897 = vmatpush1.bf16.msra.mxu0 0
      %898 = vmatprep.subr.bf16.mxu0 0
      %899 = vmatpush1.bf16.msra.mxu0 0
      %900 = vmatprep.subr.bf16.mxu0 0
      %901 = vmatpush1.bf16.msra.mxu0 0
      %902 = vmatprep.subr.bf16.mxu0 0
      %903 = vmatpush1.bf16.msra.mxu0 0
      %904 = vmatprep.subr.bf16.mxu0 0
      %905 = vmatpush1.bf16.msra.mxu0 0
      %906 = vmatprep.subr.bf16.mxu0 0
      %907 = vmatpush1.bf16.msra.mxu0 0
      %908 = vmatprep.subr.bf16.mxu0 0
      %909 = vmatpush1.bf16.msra.mxu0 0
      %910 = vmatprep.subr.bf16.mxu0 0
      %911 = vmatpush1.bf16.msra.mxu0 0
      %912 = vmatprep.subr.bf16.mxu0 0
      %913 = vmatpush1.bf16.msra.mxu0 0
      %914 = vmatprep.subr.bf16.mxu0 0
      %915 = vmatpush1.bf16.msra.mxu0 0
      %916 = vmatprep.subr.bf16.mxu0 0
      %917 = vmatpush1.bf16.msra.mxu0 0
      %918 = vmatprep.subr.bf16.mxu0 0
      %919 = vmatpush1.bf16.msra.mxu0 0
      %920 = vmatprep.subr.bf16.mxu0 0
      %921 = vmatpush1.bf16.msra.mxu0 0
      %922 = vmatprep.subr.bf16.mxu0 0
      %923 = vmatpush1.bf16.msra.mxu0 0
      %924 = vmatprep.subr.bf16.mxu0 0
      %925 = vmatpush1.bf16.msra.mxu0 0
      %926 = vmatprep.mubr.bf16.mxu0 0
      %927 = vmatmul.mubr.bf16.gmra.mrb[0].mxu0 %v886
      %v928 = vpop.f32.mrb[0].mxu0
      %v929 = vadd.f32 0.0, %v928
      %v930 = vpop.f32.mrb[0].mxu0
      %v931 = vpop.f32.mrb[0].mxu0
      %v932 = vadd.f32 0.0, %v931
      %v933 = vpop.f32.mrb[0].mxu0
      %934 = vmatprep.mubr.bf16.mxu0 0
      %935 = vmatmul.mubr.bf16.gmra.mrb[0].mxu0 %v889
      %v936 = vpop.f32.mrb[0].mxu0
      %v937 = vadd.f32 0.0, %v936
      %v938 = vpop.f32.mrb[0].mxu0
      %v939 = vpop.f32.mrb[0].mxu0
      %v940 = vadd.f32 0.0, %v939
      %v941 = vpop.f32.mrb[0].mxu0
      %942 = vdwg.mxu0
      %v943 = vadd.f32 %v862, %v929
      %v944 = vadd.f32 %v863, %v932
      %v945 = vadd.f32 %v864, %v937
      %v946 = vadd.f32 %v865, %v940
      %v947 = vld [vmem:[%s787] sm:$0xf]
      %v948 = vld [vmem:[%s787 + $0x4] sm:$0x1]
      %v949 = vld [vmem:[%s787 + $0x8] sm:$0xf]
      %v950 = vld [vmem:[%s787 + $0xc] sm:$0x1]
      %v951 = vld [vmem:[%s787 + $0x10] sm:$0xf]
      %v952 = vld [vmem:[%s787 + $0x14] sm:$0x1]
      %v953 = vld [vmem:[%s787 + $0x18] sm:$0xf]
      %v954 = vld [vmem:[%s787 + $0x1c] sm:$0x1]
      %v956 = vshrl.u32 %v947, 16
      %v958 = vrot.slane %v956, 4
      %v959 = vshll.u32 %v947, 16
      %v961 = vrot.slane %v959, 5
      %v962 = vor.u32 %v958, %v961
      %v963 = vrot.slane %v962, 4
      %v965 = vshll.u32 %v948, 16
      %v967 = vrot.slane %v965, 5
      %v968 = vsel %vm361, %v963, %v967
      %v970 = vshrl.u32 %v949, 16
      %v972 = vrot.slane %v970, 4
      %v973 = vshll.u32 %v949, 16
      %v975 = vrot.slane %v973, 5
      %v976 = vor.u32 %v972, %v975
      %v977 = vrot.slane %v976, 4
      %v979 = vshll.u32 %v950, 16
      %v981 = vrot.slane %v979, 5
      %v982 = vsel %vm361, %v977, %v981
      %v984 = vshrl.u32 %v951, 16
      %v986 = vrot.slane %v984, 4
      %v987 = vshll.u32 %v951, 16
      %v989 = vrot.slane %v987, 5
      %v990 = vor.u32 %v986, %v989
      %v991 = vrot.slane %v990, 4
      %v993 = vshll.u32 %v952, 16
      %v995 = vrot.slane %v993, 5
      %v996 = vsel %vm361, %v991, %v995
      %v998 = vshrl.u32 %v953, 16
      %v1000 = vrot.slane %v998, 4
      %v1001 = vshll.u32 %v953, 16
      %v1003 = vrot.slane %v1001, 5
      %v1004 = vor.u32 %v1000, %v1003
      %v1005 = vrot.slane %v1004, 4
      %v1007 = vshll.u32 %v954, 16
      %v1009 = vrot.slane %v1007, 5
      %v1010 = vsel %vm361, %v1005, %v1009
      %s1011 = scalar_lea.vmem %s1, 16
      %v1012 = vld [vmem:[%s1011] sm:$0x3]
      %v1013 = vunpack.c.l.b16 %v968
      %v1014 = vunpack.c.l.b16 %v982
      %v1015 = vunpack.c.l.b16 %v996
      %v1016 = vunpack.c.l.b16 %v1010
      %v1017 = vpack.c.b16 %v1014, %v1013
      %v1018 = vpack.c.b16 %v1016, %v1015
      %v1020 = vsel %vm223, %v1017, 0
      %v1023 = vsel %vm223, %v1018, 0
      %v1026 = vsel %vm230, %v1012, 0
      %1028 = vmatprep.subr.bf16.mxu0 0
      %1029 = vmatpush1.bf16.msra.mxu0 %v1026
      %1030 = vmatprep.subr.bf16.mxu0 0
      %1031 = vmatpush1.bf16.msra.mxu0 0
      %1032 = vmatprep.subr.bf16.mxu0 0
      %1033 = vmatpush1.bf16.msra.mxu0 0
      %1034 = vmatprep.subr.bf16.mxu0 0
      %1035 = vmatpush1.bf16.msra.mxu0 0
      %1036 = vmatprep.subr.bf16.mxu0 0
      %1037 = vmatpush1.bf16.msra.mxu0 0
      %1038 = vmatprep.subr.bf16.mxu0 0
      %1039 = vmatpush1.bf16.msra.mxu0 0
      %1040 = vmatprep.subr.bf16.mxu0 0
      %1041 = vmatpush1.bf16.msra.mxu0 0
      %1042 = vmatprep.subr.bf16.mxu0 0
      %1043 = vmatpush1.bf16.msra.mxu0 0
      %1044 = vmatprep.subr.bf16.mxu0 0
      %1045 = vmatpush1.bf16.msra.mxu0 0
      %1046 = vmatprep.subr.bf16.mxu0 0
      %1047 = vmatpush1.bf16.msra.mxu0 0
      %1048 = vmatprep.subr.bf16.mxu0 0
      %1049 = vmatpush1.bf16.msra.mxu0 0
      %1050 = vmatprep.subr.bf16.mxu0 0
      %1051 = vmatpush1.bf16.msra.mxu0 0
      %1052 = vmatprep.subr.bf16.mxu0 0
      %1053 = vmatpush1.bf16.msra.mxu0 0
      %1054 = vmatprep.subr.bf16.mxu0 0
      %1055 = vmatpush1.bf16.msra.mxu0 0
      %1056 = vmatprep.subr.bf16.mxu0 0
      %1057 = vmatpush1.bf16.msra.mxu0 0
      %1058 = vmatprep.subr.bf16.mxu0 0
      %1059 = vmatpush1.bf16.msra.mxu0 0
      %1060 = vmatprep.mubr.bf16.mxu0 0
      %1061 = vmatmul.mubr.bf16.gmra.mrb[0].mxu0 %v1020
      %v1062 = vpop.f32.mrb[0].mxu0
      %v1063 = vadd.f32 0.0, %v1062
      %v1064 = vpop.f32.mrb[0].mxu0
      %v1065 = vpop.f32.mrb[0].mxu0
      %v1066 = vadd.f32 0.0, %v1065
      %v1067 = vpop.f32.mrb[0].mxu0
      %1068 = vmatprep.mubr.bf16.mxu0 0
      %1069 = vmatmul.mubr.bf16.gmra.mrb[0].mxu0 %v1023
      %v1070 = vpop.f32.mrb[0].mxu0
      %v1071 = vadd.f32 0.0, %v1070
      %v1072 = vpop.f32.mrb[0].mxu0
      %v1073 = vpop.f32.mrb[0].mxu0
      %v1074 = vadd.f32 0.0, %v1073
      %v1075 = vpop.f32.mrb[0].mxu0
      %1076 = vdwg.mxu0
      %v1077 = vadd.f32 %v943, %v1063
      %v1078 = vadd.f32 %v944, %v1066
      %v1079 = vadd.f32 %v945, %v1071
      %v1080 = vadd.f32 %v946, %v1074
      %v1081 = vld [vmem:[%s2] sm:$0x1]
      %v1083 = vlaneseq
      %v1084 = vshrl.u32 %v1083, 7
      %v1085 = vsub.s32 0, %v1084
      %v1086 = vrot.slane %v1081, %v1085
      %v1088 = vadd.f32 %v1077, %v1086
      %v1089 = vadd.f32 %v1078, %v1086
      %v1090 = vadd.f32 %v1079, %v1086
      %v1091 = vadd.f32 %v1080, %v1086
      %1092 = vst.msk [vmem:[%s192] sm:$0xff] %vm223, %v1088
      %1093 = vst.msk [vmem:[%s192 + $0x8] sm:$0xff] %vm223, %v1089
      %1094 = vst.msk [vmem:[%s192 + $0x10] sm:$0xff] %vm223, %v1090
      %1095 = vst.msk [vmem:[%s192 + $0x18] sm:$0xff] %vm223, %v1091
      %s1096 = smul.u32 4, %s19
      %p1097 = scmp.lt.s32.totalorder %s18, 1
      %s1098 = scalar_select %p1097, %s18, 1
      %p1099 = scmp.lt.s32.totalorder %s1096, 7
      %s1100 = scalar_select %p1099, %s1096, 7
      %s1101 = smul.addr %s1098, 8
      %s1102 = sadd.s32 %s1100, %s1101
      %s1103 = smul.addr %s1102, 8
      %s1104 = scalar_lea.vmem %s3, %s1103
      // Predicated region
      $region33: #{downsample.1} parent=31 // pred_check
        %p1105 = pneg %p114
      $region34: #{downsample.1} parent=31 // pred_check_branch
        %1107 = sbr.rel (%p1105) target = $region36
      $region35: #{downsample.1} parent=31 // pred_region
        %s1108 = smul.u32 4, %s19
      $region36: #{downsample.1} parent=31 // pred_fallthru
        _
    $region32: #{downsample.1} parent=5 // pred_fallthru
      _
    %p1109 = scmp.le.s32.totalorder 2, %s9
    // Predicated region
    $region37: #{downsample.1} parent=5 // pred_check
      %p1110 = pneg %p1109
    $region38: #{downsample.1} parent=5 // pred_check_branch
      %1112 = sbr.rel (%p1110) target = $region40
    $region39: #{downsample.1} parent=5 // pred_region
      %s1113 = ssub.s32 %s9, 2
      // Predicated region
      $region41: #{downsample.1} parent=39 // pred_check
        %p1114 = pneg %p120
      $region42: #{downsample.1} parent=39 // pred_check_branch
        %1116 = sbr.rel (%p1114) target = $region44
      $region43: #{downsample.1} parent=39 // pred_region
        %s1117 = smul.u32 4, %s21
        %p1118 = scmp.lt.s32.totalorder %s20, 1
        %s1119 = scalar_select %p1118, %s20, 1
        %p1120 = scmp.lt.s32.totalorder %s1117, 7
        %s1121 = scalar_select %p1120, %s1117, 7
        %s1122 = smul.addr %s1119, 8
        %s1123 = sadd.s32 %s1121, %s1122
        %s1124 = smul.addr %s1123, 8
        %s1125 = scalar_lea.vmem %s3, %s1124
      $region44: #{downsample.1} parent=39 // pred_fallthru
        _
    $region40: #{downsample.1} parent=5 // pred_fallthru
      _
  $region6: #{downsample.1} parent=0 // loop_footer
    %s13 = sadd.s32 1, %s9
  $region7: #{downsample.1} parent=0 // loop_footer_branch
    %8 = sbr.rel target = $region3
  $region8: #{downsample.1} parent=0 // loop_exit
    _

</llo_original>
